<compile_context>
chip_gen: v7x
topology: tpu7x:2x2x1
jax: 0.10.0
libtpu: 0.0.40
codegen_flags: <defaults>
</compile_context>

<pallas_src>
import jax
import jax.numpy as jnp
from jax import lax
from jax.experimental import pallas as pl
from jax.experimental.pallas import tpu as pltpu


def _round_up(x, m):
    return ((x + m - 1) // m) * m


def _downsample_conv_kernel(r_ref, rh_ref, w0_ref, w1_ref, b_ref, o_ref):
    """One (batch, H-tile, N-tile) grid step.

    r_ref  : (1, TH, Wop, Kp)      main activation tile, K ordered (ph, kw, c_in)
    rh_ref : (1, 1, Wop, Kphalf)   one halo row (row index (h+1)*TH of R), ph=0 taps only
    w0_ref : (Kp, TN)              dh=0 weight block (kh in {0,1})
    w1_ref : (Kphalf, TN)          dh=1 weight block (kh=2 only; rows >= 3C are zero)
    b_ref  : (1, TN)               f32 bias row
    o_ref  : (1, TH, Wop, TN)      output tile (lane-dense TN)
    """
    th, wop, tn = o_ref.shape[1], o_ref.shape[2], o_ref.shape[3]
    kp = r_ref.shape[3]
    kph = w1_ref.shape[0]

    # dh = 0 tap: all TH rows, full Kp.  Leading-dim reshape is layout-trivial
    # because Wop is a multiple of the sublane packing.
    lhs0 = r_ref[0].reshape(th * wop, kp)
    acc = jnp.dot(lhs0, w0_ref[...], preferred_element_type=jnp.float32)

    bias = b_ref[...]                                   # (1, TN) f32 broadcast

    # dh = 1 tap: output row i uses input row i+1.  Rows 1..TH-1 come from the main
    # block (a pure leading-dim shift); the tile's last output row uses the halo row.
    # Only the first Kphalf K-entries carry non-zero weights (kh=3 slot is zero).
    if th > 1:
        lhs1 = r_ref[0, 1:, :, :kph].reshape((th - 1) * wop, kph)
        head = acc[: (th - 1) * wop] + jnp.dot(
            lhs1, w1_ref[...], preferred_element_type=jnp.float32) + bias
        o_ref[0, : th - 1] = head.reshape(th - 1, wop, tn).astype(o_ref.dtype)

    lhsh = rh_ref[0, 0, :, :]                           # (Wop, Kphalf)
    tail = acc[(th - 1) * wop:] + jnp.dot(
        lhsh, w1_ref[...], preferred_element_type=jnp.float32) + bias
    o_ref[0, th - 1:] = tail.reshape(1, wop, tn).astype(o_ref.dtype)


def downsample_pallas(x_nchw, weight, bias, *, compute_dtype=jnp.bfloat16,
                      out_dtype=None, target_rows_per_tile=2048,
                      r_tile_budget_bytes=4 << 20):
    """Reproduces nn.Conv2d(dim, dim, 3, stride=2, padding=1) forward.

    x_nchw : [B, C, H, W]          float32
    weight : [C_out, C_in, 3, 3]   (PyTorch OIHW)
    bias   : [C_out]
    returns: [B, C_out, H_out, W_out]  (NCHW, H_out = floor((H-1)/2)+1)
    """
    B, C, H, W = x_nchw.shape
    C_out = weight.shape[0]
    H_out = (H + 2 - 3) // 2 + 1
    W_out = (W + 2 - 3) // 2 + 1
    out_dtype = x_nchw.dtype if out_dtype is None else out_dtype

    # ---- tile / padding geometry -------------------------------------------------
    itemsize = jnp.dtype(compute_dtype).itemsize
    w_mult = 8 * (4 // itemsize)                     # sublane packing: 8 f32 / 16 bf16
    Wop = _round_up(W_out, w_mult)

    K = 6 * C                                        # (ph in {0,1}) x (kw in {0,1,2}) x C
    Kp = _round_up(K, 128)                           # lane-dense LHS / clean MXU K feed
    Kphalf = _round_up(3 * C, 128)                   # dh=1 uses only the ph=0 half
    assert Kphalf <= Kp

    Cp = _round_up(C_out, 128)                       # lane-dense output stores
    TN = 128
    for cand in (512, 256, 128):                     # N-tiling so big-C weights stream
        if Cp % cand == 0:
            TN = cand
            break
    while TN > 128 and Kp * TN * itemsize > (8 << 20):
        TN //= 2
    nN = Cp // TN

    rows_budget = max(Wop, r_tile_budget_bytes // max(Kp * itemsize, 1))
    rows = min(target_rows_per_tile, rows_budget)
    TH = max(1, min(H_out, rows // Wop))
    nH = pl.cdiv(H_out, TH)
    H_out_pad = nH * TH

    # ---- glue (plain JAX, in compute_dtype): NHWC, pad, H space-to-depth,
    #      W-only im2col.  K ordering is (ph, kw, c_in). -------------------------
    x = jnp.transpose(x_nchw.astype(compute_dtype), (0, 2, 3, 1))    # [B, H, W, C]
    Hp = 2 * H_out_pad + 2
    Wp = 2 * Wop + 2
    xp = jnp.pad(x, ((0, 0), (1, Hp - H - 1), (1, Wp - W - 1), (0, 0)))
    xh = xp.reshape(B, H_out_pad + 1, 2, Wp, C)                      # row = 2*i + ph
    taps = [
        lax.slice(xh, (0, 0, 0, kw, 0),
                  (B, H_out_pad + 1, 2, kw + 2 * Wop - 1, C),
                  (1, 1, 1, 2, 1))                                   # col = 2*wo + kw
        for kw in range(3)
    ]
    R = jnp.stack(taps, axis=3)                                      # [B, i, ph, kw, wo, C]
    R = jnp.transpose(R, (0, 1, 4, 2, 3, 5)).reshape(B, H_out_pad + 1, Wop, K)
    R = jnp.pad(R, ((0, 0), (0, 0), (0, 0), (0, Kp - K)))            # zero K pad

    # ---- weights: split per dh, trim the dead kh=3 half of the dh=1 matrix --------
    w_hwio = jnp.transpose(weight, (2, 3, 1, 0))                     # [kh, kw, C, C_out]
    w0 = w_hwio[:2].reshape(6 * C, C_out)                            # kh in {0,1}
    w1 = w_hwio[2].reshape(3 * C, C_out)                             # kh = 2 only
    # NOTE: rows [3C, Kphalf) of w1 MUST stay zero (they meet real ph=1 activations).
    w0 = jnp.pad(w0, ((0, Kp - 6 * C), (0, Cp - C_out))).astype(compute_dtype)
    w1 = jnp.pad(w1, ((0, Kphalf - 3 * C), (0, Cp - C_out))).astype(compute_dtype)
    b_row = jnp.pad(bias, (0, Cp - C_out)).reshape(1, Cp).astype(jnp.float32)

    # ---- hot path: tiled, pipelined MXU matmuls (no halo-duplicated slab) ---------
    out_tiles = pl.pallas_call(
        _downsample_conv_kernel,
        out_shape=jax.ShapeDtypeStruct((B, H_out_pad, Wop, Cp), out_dtype),
        grid=(B, nH, nN),
        in_specs=[
            # main tile: rows [h*TH, (h+1)*TH) of R
            pl.BlockSpec((1, TH, Wop, Kp), lambda b, h, n: (b, h, 0, 0)),
            # halo: single row (h+1)*TH (exists thanks to the +1 zero row in R),
            # only the first Kphalf K-entries are needed for the dh=1 tap.
            pl.BlockSpec((1, 1, Wop, Kphalf), lambda b, h, n: (b, (h + 1) * TH, 0, 0)),
            pl.BlockSpec((Kp, TN), lambda b, h, n: (0, n)),          # dh=0 weights
            pl.BlockSpec((Kphalf, TN), lambda b, h, n: (0, n)),      # dh=1 weights
            pl.BlockSpec((1, TN), lambda b, h, n: (0, n)),           # bias
        ],
        out_specs=pl.BlockSpec((1, TH, Wop, TN), lambda b, h, n: (b, h, 0, n)),
        compiler_params=pltpu.CompilerParams(
            dimension_semantics=("parallel", "parallel", "arbitrary"),
            vmem_limit_bytes=48 * 1024 * 1024),
    )(R, R, w0, w1, b_row)

    out = out_tiles.reshape(B, H_out_pad, Wop, Cp)[:, :H_out, :W_out, :C_out]
    # TODO(synk): keep NHWC (and optionally bf16) end-to-end in the surrounding model to
    # drop this slice + NCHW transpose (two extra full output HBM passes).
    return jnp.transpose(out, (0, 3, 1, 2))                          # back to NCHW


if __name__ == "__main__":
    key = jax.random.PRNGKey(0)
    k_x, k_w, k_b = jax.random.split(key, 3)

    B, C, H, W = 2, 4, 16, 16
    x = jax.random.normal(k_x, (B, C, H, W), jnp.float32)

    # deterministic params (PyTorch Conv2d default init range)
    fan_in = C * 3 * 3
    bound = 1.0 / (fan_in ** 0.5)
    weight = jax.random.uniform(k_w, (C, C, 3, 3), jnp.float32, -bound, bound)
    bias = jax.random.uniform(k_b, (C,), jnp.float32, -bound, bound)

    # reference: XLA conv with the same semantics as torch.nn.Conv2d(3, 2, 1)
    ref = lax.conv_general_dilated(
        x, weight, window_strides=(2, 2), padding=((1, 1), (1, 1)),
        dimension_numbers=("NCHW", "OIHW", "NCHW"),
    ) + bias.reshape(1, C, 1, 1)

    # f32 compute path: tight check against the f32 reference.
    out_f32 = jax.block_until_ready(
        downsample_pallas(x, weight, bias, compute_dtype=jnp.float32))
    assert out_f32.shape == (B, C, 8, 8), out_f32.shape
    assert jnp.allclose(out_f32, ref, atol=1e-5, rtol=1e-5), \
        float(jnp.max(jnp.abs(out_f32 - ref)))

    # bf16 MXU path (default fast path on v5e/v6e/v7x): f32 accumulation, looser tol.
    out_bf16 = jax.block_until_ready(
        downsample_pallas(x, weight, bias, compute_dtype=jnp.bfloat16))
    assert out_bf16.shape == (B, C, 8, 8), out_bf16.shape
    assert jnp.allclose(out_bf16, ref, atol=5e-2, rtol=5e-2), \
        float(jnp.max(jnp.abs(out_bf16 - ref)))

    print("KERNEL_OK")
</pallas_src>

<mosaic_0001>
module attributes {stable_mosaic.version = 11 : i64} {
  func.func @_downsample_conv_kernel(%arg0: i32, %arg1: i32, %arg2: i32, %arg3: memref<1x8x8x128xf32, #tpu.memory_space<vmem>>, %arg4: memref<1x1x8x128xf32, #tpu.memory_space<vmem>>, %arg5: memref<128x128xf32, #tpu.memory_space<vmem>>, %arg6: memref<128x128xf32, #tpu.memory_space<vmem>>, %arg7: memref<1x128xf32, #tpu.memory_space<vmem>>, %arg8: memref<1x8x8x128xf32, #tpu.memory_space<vmem>>) attributes {dimension_semantics = [#tpu.dimension_semantics<parallel>, #tpu.dimension_semantics<parallel>, #tpu.dimension_semantics<arbitrary>], iteration_bounds = array<i64: 2, 1, 1>, scalar_prefetch = 0 : i64, scratch_operands = 0 : i64, tpu.core_type = #tpu.core_type<tc>, window_params = [{transform_indices = @transform_0, window_bounds = array<i64: 1, 8, 8, 128>}, {transform_indices = @transform_1, window_bounds = array<i64: 1, 1, 8, 128>}, {transform_indices = @transform_2, window_bounds = array<i64: 128, 128>}, {transform_indices = @transform_3, window_bounds = array<i64: 128, 128>}, {transform_indices = @transform_4, window_bounds = array<i64: 1, 128>}, {transform_indices = @transform_5, window_bounds = array<i64: 1, 8, 8, 128>}]} {
    %c0 = arith.constant 0 : index
    %c0_0 = arith.constant 0 : index
    %c0_1 = arith.constant 0 : index
    %c0_2 = arith.constant 0 : index
    %0 = vector.load %arg3[%c0, %c0_0, %c0_1, %c0_2] : memref<1x8x8x128xf32, #tpu.memory_space<vmem>>, vector<1x8x8x128xf32>
    %1 = vector.shape_cast %0 : vector<1x8x8x128xf32> to vector<8x8x128xf32>
    %2 = vector.shape_cast %1 : vector<8x8x128xf32> to vector<64x128xf32>
    %c0_3 = arith.constant 0 : index
    %c0_4 = arith.constant 0 : index
    %3 = vector.load %arg5[%c0_3, %c0_4] : memref<128x128xf32, #tpu.memory_space<vmem>>, vector<128x128xf32>
    %cst = arith.constant dense<0.000000e+00> : vector<64x128xf32>
    %4 = tpu.matmul %2, %3, %cst {dimension_numbers = #tpu.dot_dimension_numbers<[1], [0], [0], [1], [0, 0, 1, 1], [], []>} : vector<64x128xf32>, vector<128x128xf32>, vector<64x128xf32> -> vector<64x128xf32>
    %c0_5 = arith.constant 0 : index
    %c0_6 = arith.constant 0 : index
    %5 = vector.load %arg7[%c0_5, %c0_6] : memref<1x128xf32, #tpu.memory_space<vmem>>, vector<1x128xf32>
    %c0_7 = arith.constant 0 : index
    %c1 = arith.constant 1 : index
    %c0_8 = arith.constant 0 : index
    %c0_9 = arith.constant 0 : index
    %6 = vector.load %arg3[%c0_7, %c1, %c0_8, %c0_9] : memref<1x8x8x128xf32, #tpu.memory_space<vmem>>, vector<1x7x8x128xf32>
    %7 = vector.shape_cast %6 : vector<1x7x8x128xf32> to vector<7x8x128xf32>
    %8 = vector.shape_cast %7 : vector<7x8x128xf32> to vector<56x128xf32>
    %9 = vector.extract_strided_slice %4 {offsets = [0, 0], sizes = [56, 128], strides = [1, 1]} : vector<64x128xf32> to vector<56x128xf32>
    %c0_10 = arith.constant 0 : index
    %c0_11 = arith.constant 0 : index
    %10 = vector.load %arg6[%c0_10, %c0_11] : memref<128x128xf32, #tpu.memory_space<vmem>>, vector<128x128xf32>
    %cst_12 = arith.constant dense<0.000000e+00> : vector<56x128xf32>
    %11 = tpu.matmul %8, %10, %cst_12 {dimension_numbers = #tpu.dot_dimension_numbers<[1], [0], [0], [1], [0, 0, 1, 1], [], []>} : vector<56x128xf32>, vector<128x128xf32>, vector<56x128xf32> -> vector<56x128xf32>
    %12 = arith.addf %9, %11 : vector<56x128xf32>
    %13 = vector.broadcast %5 : vector<1x128xf32> to vector<56x128xf32>
    %14 = arith.addf %12, %13 : vector<56x128xf32>
    %15 = vector.shape_cast %14 : vector<56x128xf32> to vector<7x8x128xf32>
    %c0_13 = arith.constant 0 : index
    %c0_14 = arith.constant 0 : index
    %c0_15 = arith.constant 0 : index
    %c0_16 = arith.constant 0 : index
    %16 = vector.load %arg8[%c0_13, %c0_14, %c0_15, %c0_16] : memref<1x8x8x128xf32, #tpu.memory_space<vmem>>, vector<1x7x8x128xf32>
    %17 = vector.shape_cast %16 : vector<1x7x8x128xf32> to vector<7x8x128xf32>
    %18 = vector.shape_cast %15 : vector<7x8x128xf32> to vector<1x7x8x128xf32>
    tpu.vector_store %arg8[%c0_13, %c0_14, %c0_15, %c0_16], %18 {strides = array<i32>} : memref<1x8x8x128xf32, #tpu.memory_space<vmem>>, vector<1x7x8x128xf32>,
    %c0_17 = arith.constant 0 : index
    %c0_18 = arith.constant 0 : index
    %c0_19 = arith.constant 0 : index
    %c0_20 = arith.constant 0 : index
    %19 = vector.load %arg4[%c0_17, %c0_18, %c0_19, %c0_20] : memref<1x1x8x128xf32, #tpu.memory_space<vmem>>, vector<1x1x8x128xf32>
    %20 = vector.shape_cast %19 : vector<1x1x8x128xf32> to vector<8x128xf32>
    %21 = vector.extract_strided_slice %4 {offsets = [56, 0], sizes = [8, 128], strides = [1, 1]} : vector<64x128xf32> to vector<8x128xf32>
    %c0_21 = arith.constant 0 : index
    %c0_22 = arith.constant 0 : index
    %22 = vector.load %arg6[%c0_21, %c0_22] : memref<128x128xf32, #tpu.memory_space<vmem>>, vector<128x128xf32>
    %cst_23 = arith.constant dense<0.000000e+00> : vector<8x128xf32>
    %23 = tpu.matmul %20, %22, %cst_23 {dimension_numbers = #tpu.dot_dimension_numbers<[1], [0], [0], [1], [0, 0, 1, 1], [], []>} : vector<8x128xf32>, vector<128x128xf32>, vector<8x128xf32> -> vector<8x128xf32>
    %24 = arith.addf %21, %23 : vector<8x128xf32>
    %25 = vector.broadcast %5 : vector<1x128xf32> to vector<8x128xf32>
    %26 = arith.addf %24, %25 : vector<8x128xf32>
    %27 = vector.shape_cast %26 : vector<8x128xf32> to vector<1x8x128xf32>
    %c0_24 = arith.constant 0 : index
    %c7 = arith.constant 7 : index
    %c0_25 = arith.constant 0 : index
    %c0_26 = arith.constant 0 : index
    %28 = vector.load %arg8[%c0_24, %c7, %c0_25, %c0_26] : memref<1x8x8x128xf32, #tpu.memory_space<vmem>>, vector<1x1x8x128xf32>
    %29 = vector.shape_cast %28 : vector<1x1x8x128xf32> to vector<1x8x128xf32>
    %30 = vector.shape_cast %27 : vector<1x8x128xf32> to vector<1x1x8x128xf32>
    tpu.vector_store %arg8[%c0_24, %c7, %c0_25, %c0_26], %30 {strides = array<i32>} : memref<1x8x8x128xf32, #tpu.memory_space<vmem>>, vector<1x1x8x128xf32>,
    return
  }
  func.func @transform_0(%arg0: i32, %arg1: i32, %arg2: i32) -> (i32, i32, i32, i32) {
    %c0_i32 = arith.constant 0 : i32
    %c0_i32_0 = arith.constant 0 : i32
    %c0_i32_1 = arith.constant 0 : i32
    return %arg0, %arg1, %c0_i32, %c0_i32_0 : i32, i32, i32, i32
  }
  func.func @transform_1(%arg0: i32, %arg1: i32, %arg2: i32) -> (i32, i32, i32, i32) {
    %c1_i32 = arith.constant 1 : i32
    %0 = arith.addi %arg1, %c1_i32 : i32
    %c8_i32 = arith.constant 8 : i32
    %1 = arith.muli %0, %c8_i32 : i32
    %c0_i32 = arith.constant 0 : i32
    %c0_i32_0 = arith.constant 0 : i32
    %c0_i32_1 = arith.constant 0 : i32
    return %arg0, %1, %c0_i32, %c0_i32_0 : i32, i32, i32, i32
  }
  func.func @transform_2(%arg0: i32, %arg1: i32, %arg2: i32) -> (i32, i32) {
    %c0_i32 = arith.constant 0 : i32
    %c0_i32_0 = arith.constant 0 : i32
    return %c0_i32, %arg2 : i32, i32
  }
  func.func @transform_3(%arg0: i32, %arg1: i32, %arg2: i32) -> (i32, i32) {
    %c0_i32 = arith.constant 0 : i32
    %c0_i32_0 = arith.constant 0 : i32
    return %c0_i32, %arg2 : i32, i32
  }
  func.func @transform_4(%arg0: i32, %arg1: i32, %arg2: i32) -> (i32, i32) {
    %c0_i32 = arith.constant 0 : i32
    %c0_i32_0 = arith.constant 0 : i32
    return %c0_i32, %arg2 : i32, i32
  }
  func.func @transform_5(%arg0: i32, %arg1: i32, %arg2: i32) -> (i32, i32, i32, i32) {
    %c0_i32 = arith.constant 0 : i32
    %c0_i32_0 = arith.constant 0 : i32
    return %arg0, %arg1, %c0_i32, %arg2 : i32, i32, i32, i32
  }
}

</mosaic_0001>

<llo_original>
// kernel: tpu_custom_call.1
$region0: #{tpu_custom_call.1}
  #allocation0 [shape = 'u32[]', space=smem, size = 0x4, offset = 0x4, fixed_abs, tag = 'smem constant byte address 0x4 - core index']
  #allocation1 [shape = 'u32[144,128]{1,0:T(1,128)}', space=vmem, size = 0x12000, scoped, tag = 'internal scratch']
  %s0 = inlined_call_operand.hbm [shape: f32[2,9,8,128], index: 0, kind: input, shape index: {}]
  %s1 = inlined_call_operand.hbm [shape: f32[2,9,8,128], index: 1, kind: input, shape index: {}]
  %s2 = inlined_call_operand.hbm [shape: f32[128,128], index: 2, kind: input, shape index: {}]
  %s3 = inlined_call_operand.hbm [shape: f32[128,128], index: 3, kind: input, shape index: {}]
  %s4 = inlined_call_operand.vmem [shape: f32[1,128], index: 4, kind: input, shape index: {}]
  %s5 = inlined_call_operand.hbm [shape: f32[2,8,8,128], index: 5, kind: output, shape index: {}]
  %s6 = sld [smem:[#allocation0]]
  $region69: #{tpu_custom_call.1} parent=0
    _
  %s8 = ssub.s32 1, %s6
  %s9 = scalar_select 0, %s8, %s6
  $region1: #{tpu_custom_call.1} parent=0
    #allocation2 [shape = 'u8[65536]{0}', space=vmem, size = 0x10000, scoped, tag = 'input window, operand 0']
    #allocation3 [shape = 's32[2]{0}', space=sflag, size = 0x8, scoped, tag = 'scoped memory for tpu_custom_call.1']
    #allocation4 [shape = 's32[2]{0}', space=sflag, size = 0x8, scoped, tag = 'scoped memory for tpu_custom_call.1']
    #allocation5 [shape = 'u8[8192]{0}', space=vmem, size = 0x2000, scoped, tag = 'input window, operand 1']
    #allocation6 [shape = 's32[2]{0}', space=sflag, size = 0x8, scoped, tag = 'scoped memory for tpu_custom_call.1']
    #allocation7 [shape = 'u8[65536]{0}', space=vmem, size = 0x10000, scoped, tag = 'input window, operand 2, single buffered']
    #allocation8 [shape = 'u8[65536]{0}', space=vmem, size = 0x10000, scoped, tag = 'input window, operand 3, single buffered']
    #allocation9 [shape = 's32[1]{0}', space=sflag, size = 0x4, scoped, tag = 'scoped memory for tpu_custom_call.1']
    #allocation10 [shape = 'u8[65536]{0}', space=vmem, size = 0x10000, scoped, tag = 'output window, operand 0']
    %10 = vsyncpa [#allocation3], 0
    %s11 = scalar_lea.sflag [#allocation3], 1
    %12 = vsyncpa %s11, 0
    %13 = vsyncpa [#allocation6], 0
    %s14 = scalar_lea.sflag [#allocation6], 1
    %15 = vsyncpa %s14, 0
    %16 = vsyncpa [#allocation9], 0
    %17 = vsyncpa [#allocation4], 0
    %s18 = scalar_lea.sflag [#allocation4], 1
    %19 = vsyncpa %s18, 0
    loop: start=0, step=1, limit=4
    $region2: #{tpu_custom_call.1} parent=1 // loop_pre_header
      _
    $region3: #{tpu_custom_call.1} parent=1 // loop_header
      %s21 = sphi 0, %s25
      %p22 = scmp.ge.s32.totalorder %s21, 4
      %s28 = sphi 0, %s47
      %s29 = sphi 0, %s43
      %s30 = sphi 0, %s39
      %s31 = sphi 0, %s28
      %s32 = sphi 0, %s29
      %s33 = sphi 0, %s30
      %s34 = sphi 0, %s31
      %s35 = sphi 0, %s32
      %s36 = sphi 0, %s33
      %s52 = sphi 0, %s54
      %s55 = sphi 0, %s52
      %s56 = sphi 0, %s55
      %s72 = sphi 0, %s56
      %s84 = sphi 0, %s86
      %s87 = sphi 0, %s84
      %s88 = sphi 0, %s87
      %s104 = sphi 0, %s88
      %s110 = sphi 0, %s112
      %s113 = sphi 0, %s110
      %s114 = sphi 0, %s113
      %s130 = sphi 0, %s114
      %s136 = sphi 0, %s138
      %s139 = sphi 0, %s136
      %s140 = sphi 0, %s139
      %s156 = sphi 0, %s140
      %s162 = sphi 0, %s164
      %s165 = sphi 0, %s162
      %s166 = sphi 0, %s165
      %s182 = sphi 0, %s166
      %s192 = sphi 0, %s194
      %s195 = sphi 0, %s192
      %s196 = sphi 0, %s195
      %s212 = sphi 0, %s196
    $region4: #{tpu_custom_call.1} parent=1 // loop_header_branch
      %24 = sbr.rel (%p22) target = $region8
    $region5: #{tpu_custom_call.1} parent=1 // loop_body
      %s26 = ssub.s32 %s21, 1
      %s27 = ssub.s32 %s21, 2
      %s37 = sadd.s32 1, %s30
      %p38 = scmp.ge.s32.totalorder %s37, 1
      %s39 = scalar_select %p38, 0, %s37
      %s40 = sadd.s32 1, %s29
      %s41 = scalar_select %p38, %s40, %s29
      %p42 = scmp.ge.s32.totalorder %s41, 1
      %s43 = scalar_select %p42, 0, %s41
      %s44 = sadd.s32 1, %s28
      %s45 = scalar_select %p42, %s44, %s28
      %p46 = scmp.ge.s32.totalorder %s45, 2
      %s47 = scalar_select %p46, 0, %s45
      %s48 = ssub.s32 %s28, %s47
      %s49 = ssub.s32 %s29, %s43
      %s50 = sor.u32 %s48, %s49
      %p51 = scmp.eq.s32.totalorder %s50, 0
      %s53 = sadd.s32 %s52, 1
      %s54 = scalar_select %p51, %s52, %s53
      %p57 = pneg %p51
      %p58 = scmp.eq.s32.totalorder %s21, 1
      %p59 = por %p57, %p58
      %p60 = scmp.ne.s32.totalorder %s52, %s55
      %p61 = scmp.eq.s32.totalorder %s21, 0
      %p62 = por %p60, %p61
      %p63 = scmp.ne.s32.totalorder %s52, %s55
      %p64 = scmp.eq.s32.totalorder %s26, 1
      %p65 = por %p63, %p64
      %p66 = scmp.ne.s32.totalorder %s55, %s56
      %p67 = scmp.eq.s32.totalorder %s26, 0
      %p68 = por %p66, %p67
      %p69 = scmp.ne.s32.totalorder %s55, %s56
      %p70 = scmp.eq.s32.totalorder %s27, 1
      %p71 = por %p69, %p70
      %p73 = scmp.ne.s32.totalorder %s56, %s72
      %p74 = scmp.eq.s32.totalorder %s27, 0
      %p75 = por %p73, %p74
      %s76 = sadd.s32 %s29, 1
      %s77 = smul.u32 %s76, 8
      %s78 = sadd.s32 %s43, 1
      %s79 = smul.u32 %s78, 8
      %s80 = ssub.s32 %s28, %s47
      %s81 = ssub.s32 %s77, %s79
      %s82 = sor.u32 %s80, %s81
      %p83 = scmp.eq.s32.totalorder %s82, 0
      %s85 = sadd.s32 %s84, 1
      %s86 = scalar_select %p83, %s84, %s85
      %p89 = pneg %p83
      %p90 = scmp.eq.s32.totalorder %s21, 1
      %p91 = por %p89, %p90
      %p92 = scmp.ne.s32.totalorder %s84, %s87
      %p93 = scmp.eq.s32.totalorder %s21, 0
      %p94 = por %p92, %p93
      %p95 = scmp.ne.s32.totalorder %s84, %s87
      %p96 = scmp.eq.s32.totalorder %s26, 1
      %p97 = por %p95, %p96
      %p98 = scmp.ne.s32.totalorder %s87, %s88
      %p99 = scmp.eq.s32.totalorder %s26, 0
      %p100 = por %p98, %p99
      %p101 = scmp.ne.s32.totalorder %s87, %s88
      %p102 = scmp.eq.s32.totalorder %s27, 1
      %p103 = por %p101, %p102
      %p105 = scmp.ne.s32.totalorder %s88, %s104
      %p106 = scmp.eq.s32.totalorder %s27, 0
      %p107 = por %p105, %p106
      %s108 = ssub.s32 %s30, %s39
      %p109 = scmp.eq.s32.totalorder %s108, 0
      %s111 = sadd.s32 %s110, 1
      %s112 = scalar_select %p109, %s110, %s111
      %p115 = pneg %p109
      %p116 = scmp.eq.s32.totalorder %s21, 1
      %p117 = por %p115, %p116
      %p118 = scmp.ne.s32.totalorder %s110, %s113
      %p119 = scmp.eq.s32.totalorder %s21, 0
      %p120 = por %p118, %p119
      %p121 = scmp.ne.s32.totalorder %s110, %s113
      %p122 = scmp.eq.s32.totalorder %s26, 1
      %p123 = por %p121, %p122
      %p124 = scmp.ne.s32.totalorder %s113, %s114
      %p125 = scmp.eq.s32.totalorder %s26, 0
      %p126 = por %p124, %p125
      %p127 = scmp.ne.s32.totalorder %s113, %s114
      %p128 = scmp.eq.s32.totalorder %s27, 1
      %p129 = por %p127, %p128
      %p131 = scmp.ne.s32.totalorder %s114, %s130
      %p132 = scmp.eq.s32.totalorder %s27, 0
      %p133 = por %p131, %p132
      %s134 = ssub.s32 %s30, %s39
      %p135 = scmp.eq.s32.totalorder %s134, 0
      %s137 = sadd.s32 %s136, 1
      %s138 = scalar_select %p135, %s136, %s137
      %p141 = pneg %p135
      %p142 = scmp.eq.s32.totalorder %s21, 1
      %p143 = por %p141, %p142
      %p144 = scmp.ne.s32.totalorder %s136, %s139
      %p145 = scmp.eq.s32.totalorder %s21, 0
      %p146 = por %p144, %p145
      %p147 = scmp.ne.s32.totalorder %s136, %s139
      %p148 = scmp.eq.s32.totalorder %s26, 1
      %p149 = por %p147, %p148
      %p150 = scmp.ne.s32.totalorder %s139, %s140
      %p151 = scmp.eq.s32.totalorder %s26, 0
      %p152 = por %p150, %p151
      %p153 = scmp.ne.s32.totalorder %s139, %s140
      %p154 = scmp.eq.s32.totalorder %s27, 1
      %p155 = por %p153, %p154
      %p157 = scmp.ne.s32.totalorder %s140, %s156
      %p158 = scmp.eq.s32.totalorder %s27, 0
      %p159 = por %p157, %p158
      %s160 = ssub.s32 %s30, %s39
      %p161 = scmp.eq.s32.totalorder %s160, 0
      %s163 = sadd.s32 %s162, 1
      %s164 = scalar_select %p161, %s162, %s163
      %p167 = pneg %p161
      %p168 = scmp.eq.s32.totalorder %s21, 1
      %p169 = por %p167, %p168
      %p170 = scmp.ne.s32.totalorder %s162, %s165
      %p171 = scmp.eq.s32.totalorder %s21, 0
      %p172 = por %p170, %p171
      %p173 = scmp.ne.s32.totalorder %s162, %s165
      %p174 = scmp.eq.s32.totalorder %s26, 1
      %p175 = por %p173, %p174
      %p176 = scmp.ne.s32.totalorder %s165, %s166
      %p177 = scmp.eq.s32.totalorder %s26, 0
      %p178 = por %p176, %p177
      %p179 = scmp.ne.s32.totalorder %s165, %s166
      %p180 = scmp.eq.s32.totalorder %s27, 1
      %p181 = por %p179, %p180
      %p183 = scmp.ne.s32.totalorder %s166, %s182
      %p184 = scmp.eq.s32.totalorder %s27, 0
      %p185 = por %p183, %p184
      %s186 = ssub.s32 %s28, %s47
      %s187 = ssub.s32 %s29, %s43
      %s188 = sor.u32 %s186, %s187
      %s189 = ssub.s32 %s30, %s39
      %s190 = sor.u32 %s188, %s189
      %p191 = scmp.eq.s32.totalorder %s190, 0
      %s193 = sadd.s32 %s192, 1
      %s194 = scalar_select %p191, %s192, %s193
      %p197 = pneg %p191
      %p198 = scmp.eq.s32.totalorder %s21, 1
      %p199 = por %p197, %p198
      %p200 = scmp.ne.s32.totalorder %s192, %s195
      %p201 = scmp.eq.s32.totalorder %s21, 0
      %p202 = por %p200, %p201
      %p203 = scmp.ne.s32.totalorder %s192, %s195
      %p204 = scmp.eq.s32.totalorder %s26, 1
      %p205 = por %p203, %p204
      %p206 = scmp.ne.s32.totalorder %s195, %s196
      %p207 = scmp.eq.s32.totalorder %s26, 0
      %p208 = por %p206, %p207
      %p209 = scmp.ne.s32.totalorder %s195, %s196
      %p210 = scmp.eq.s32.totalorder %s27, 1
      %p211 = por %p209, %p210
      %p213 = scmp.ne.s32.totalorder %s196, %s212
      %p214 = scmp.eq.s32.totalorder %s27, 0
      %p215 = por %p213, %p214
      %p216 = scmp.le.s32.totalorder 1, %s21
      %p217 = scmp.lt.s32.totalorder %s21, 3
      %p218 = pnand %p216, %p217
      %p219 = pneg %p218
      // Predicated region
      $region9: #{tpu_custom_call.1} parent=5 // pred_check
        _
      $region10: #{tpu_custom_call.1} parent=5 // pred_check_branch
        %221 = sbr.rel (%p218) target = $region12
      $region11: #{tpu_custom_call.1} parent=5 // pred_region
        %s222 = ssub.s32 %s21, 1
        // Predicated region
        $region13: #{tpu_custom_call.1} parent=11 // pred_check
          %p223 = pneg %p126
        $region14: #{tpu_custom_call.1} parent=11 // pred_check_branch
          %225 = sbr.rel (%p223) target = $region16
        $region15: #{tpu_custom_call.1} parent=11 // pred_region
          %s227 = ssub.s32 2048, 2048
          %228 = vsyncadd [#allocation6], %s227
          %s229 = smul.addr %s33, 128
          %s230 = scalar_lea.hbm %s2, %s229
          %s231 = sshll.u32 [#allocation7], 4
          %s232 = int_to_ptr.vmem [resolvable:$true] %s231
          %237 = dma.hbm_to_vmem [thread:$0]  %s230, 2048, %s232, [#allocation6], 128, 128, 8
        $region16: #{tpu_custom_call.1} parent=11 // pred_fallthru
          _
        // Predicated region
        $region17: #{tpu_custom_call.1} parent=11 // pred_check
          %p238 = pneg %p152
        $region18: #{tpu_custom_call.1} parent=11 // pred_check_branch
          %240 = sbr.rel (%p238) target = $region20
        $region19: #{tpu_custom_call.1} parent=11 // pred_region
          %s242 = ssub.s32 2048, 2048
          %243 = vsyncadd [#allocation9], %s242
          %s244 = smul.addr %s33, 128
          %s245 = scalar_lea.hbm %s3, %s244
          %s246 = sshll.u32 [#allocation8], 4
          %s247 = int_to_ptr.vmem [resolvable:$true] %s246
          %252 = dma.hbm_to_vmem [thread:$0]  %s245, 2048, %s247, [#allocation9], 128, 128, 8
        $region20: #{tpu_custom_call.1} parent=11 // pred_fallthru
          _
        // Predicated region
        $region21: #{tpu_custom_call.1} parent=11 // pred_check
          %p253 = pneg %p178
        $region22: #{tpu_custom_call.1} parent=11 // pred_check_branch
          %255 = sbr.rel (%p253) target = $region24
        $region23: #{tpu_custom_call.1} parent=11 // pred_region
          %p256 = scmp.lt.s32.totalorder %s33, 0
          %s257 = scalar_select %p256, %s33, 0
          %s258 = scalar_lea.vmem %s4, %s257
        $region24: #{tpu_custom_call.1} parent=11 // pred_fallthru
          _
      $region12: #{tpu_custom_call.1} parent=5 // pred_fallthru
        _
      %p259 = scmp.lt.s32.totalorder %s21, 2
      // Predicated region
      $region25: #{tpu_custom_call.1} parent=5 // pred_check
        %p260 = pneg %p259
      $region26: #{tpu_custom_call.1} parent=5 // pred_check_branch
        %262 = sbr.rel (%p260) target = $region28
      $region27: #{tpu_custom_call.1} parent=5 // pred_region
        // Predicated region
        $region29: #{tpu_custom_call.1} parent=27 // pred_check
          %p263 = pneg %p62
        $region30: #{tpu_custom_call.1} parent=27 // pred_check_branch
          %265 = sbr.rel (%p263) target = $region32
        $region31: #{tpu_custom_call.1} parent=27 // pred_region
          %s266 = sand.u32 %s52, 1
          %s267 = scalar_lea.sflag [#allocation3], %s266
          %s268 = sand.u32 %s52, 1
          %s269 = smul.addr %s268, 64
          %s270 = scalar_lea.vmem [#allocation2], %s269
          %s271 = smul.u32 8, %s29
          %s272 = ssub.s32 9, %s271
          %p273 = scmp.lt.s32.totalorder %s272, 8
          %s274 = scalar_select %p273, %s272, 8
          %s275 = smul.u32 128, %s274
          %s277 = ssub.s32 1024, %s275
          %278 = vsyncadd %s267, %s277
          %p279 = scmp.ne.s32.totalorder 0, %s275
          %s280 = smul.addr %s28, 9
          %s281 = sadd.s32 %s271, %s280
          %s282 = smul.addr %s281, 128
          %s283 = scalar_lea.hbm %s0, %s282
          %s284 = smul.u32 8, %s274
          %s285 = sshll.u32 %s270, 4
          %s286 = int_to_ptr.vmem [resolvable:$true] %s285
          %s287 = sshll.u32 %s284, 4
          %291 = dma.hbm_to_vmem [thread:$0]  (%p279), %s283, %s287, %s286, %s267, 128, 128, 8
        $region32: #{tpu_custom_call.1} parent=27 // pred_fallthru
          _
        // Predicated region
        $region33: #{tpu_custom_call.1} parent=27 // pred_check
          %p292 = pneg %p94
        $region34: #{tpu_custom_call.1} parent=27 // pred_check_branch
          %294 = sbr.rel (%p292) target = $region36
        $region35: #{tpu_custom_call.1} parent=27 // pred_region
          %s295 = sand.u32 %s21, 1
          %s296 = scalar_lea.sflag [#allocation6], %s295
          %s297 = sand.u32 %s84, 1
          %s298 = smul.addr %s297, 8
          %s299 = scalar_lea.vmem [#allocation5], %s298
          %s300 = sadd.s32 %s29, 1
          %s301 = smul.u32 %s300, 8
          %s303 = ssub.s32 128, 128
          %304 = vsyncadd %s296, %s303
          %s305 = smul.addr %s28, 9
          %s306 = sadd.s32 %s301, %s305
          %s307 = smul.addr %s306, 128
          %s308 = scalar_lea.hbm %s1, %s307
          %s310 = sshll.u32 %s299, 4
          %s311 = int_to_ptr.vmem [resolvable:$true] %s310
          %313 = dma.hbm_to_vmem [thread:$0]  %s308, 128, %s311, %s296
        $region36: #{tpu_custom_call.1} parent=27 // pred_fallthru
          _
      $region28: #{tpu_custom_call.1} parent=5 // pred_fallthru
        _
      %p314 = scmp.le.s32.totalorder 1, %s21
      %p315 = scmp.lt.s32.totalorder %s21, 3
      %p316 = pnand %p314, %p315
      %p317 = pneg %p316
      // Predicated region
      $region37: #{tpu_custom_call.1} parent=5 // pred_check
        _
      $region38: #{tpu_custom_call.1} parent=5 // pred_check_branch
        %319 = sbr.rel (%p316) target = $region40
      $region39: #{tpu_custom_call.1} parent=5 // pred_region
        %s320 = ssub.s32 %s21, 1
        %s321 = sand.u32 %s55, 1
        %s322 = scalar_lea.sflag [#allocation3], %s321
        %s323 = sand.u32 %s55, 1
        %s324 = smul.addr %s323, 64
        %s325 = scalar_lea.vmem [#allocation2], %s324
        // Predicated region
        $region41: #{tpu_custom_call.1} parent=39 // pred_check
          %p326 = pneg %p68
        $region42: #{tpu_custom_call.1} parent=39 // pred_check_branch
          %328 = sbr.rel (%p326) target = $region44
        $region43: #{tpu_custom_call.1} parent=39 // pred_region
          %329 = dma.done %s322, 1024
        $region44: #{tpu_custom_call.1} parent=39 // pred_fallthru
          _
        %s330 = sand.u32 %s26, 1
        %s331 = scalar_lea.sflag [#allocation6], %s330
        %s332 = sand.u32 %s87, 1
        %s333 = smul.addr %s332, 8
        %s334 = scalar_lea.vmem [#allocation5], %s333
        // Predicated region
        $region45: #{tpu_custom_call.1} parent=39 // pred_check
          %p335 = pneg %p100
        $region46: #{tpu_custom_call.1} parent=39 // pred_check_branch
          %337 = sbr.rel (%p335) target = $region48
        $region47: #{tpu_custom_call.1} parent=39 // pred_region
          %338 = dma.done %s331, 128
        $region48: #{tpu_custom_call.1} parent=39 // pred_fallthru
          _
        // Predicated region
        $region49: #{tpu_custom_call.1} parent=39 // pred_check
          %p339 = pneg %p126
        $region50: #{tpu_custom_call.1} parent=39 // pred_check_branch
          %341 = sbr.rel (%p339) target = $region52
        $region51: #{tpu_custom_call.1} parent=39 // pred_region
          %342 = dma.done [#allocation6], 2048
        $region52: #{tpu_custom_call.1} parent=39 // pred_fallthru
          _
        // Predicated region
        $region53: #{tpu_custom_call.1} parent=39 // pred_check
          %p343 = pneg %p152
        $region54: #{tpu_custom_call.1} parent=39 // pred_check_branch
          %345 = sbr.rel (%p343) target = $region56
        $region55: #{tpu_custom_call.1} parent=39 // pred_region
          %346 = dma.done [#allocation9], 2048
        $region56: #{tpu_custom_call.1} parent=39 // pred_fallthru
          _
        %s347 = sand.u32 %s55, 1
        %s348 = scalar_lea.sflag [#allocation3], %s347
        %s349 = sand.u32 %s55, 1
        %s350 = smul.addr %s349, 64
        %s351 = scalar_lea.vmem [#allocation2], %s350
        %p352 = pneg %p68
        %p353 = pneg %p65
        %s354 = sand.u32 %s26, 1
        %s355 = scalar_lea.sflag [#allocation6], %s354
        %s356 = sand.u32 %s87, 1
        %s357 = smul.addr %s356, 8
        %s358 = scalar_lea.vmem [#allocation5], %s357
        %p359 = pneg %p100
        %p360 = pneg %p97
        %p361 = pneg %p126
        %p362 = pneg %p123
        %p363 = pneg %p152
        %p364 = pneg %p149
        %p365 = scmp.lt.s32.totalorder %s33, 0
        %s366 = scalar_select %p365, %s33, 0
        %s367 = scalar_lea.vmem %s4, %s366
        %p368 = pneg %p178
        %p369 = pneg %p175
        %p370 = pneg %p208
        %p371 = pneg %p205
        %s372 = sand.u32 %s195, 1
        %s373 = scalar_lea.sflag [#allocation4], %s372
        %s374 = sand.u32 %s195, 1
        %s375 = smul.addr %s374, 64
        %s376 = scalar_lea.vmem [#allocation10], %s375
        %s377 = smul.u32 8, %s32
        %s378 = ssub.s32 9, %s377
        %p379 = scmp.lt.s32.totalorder %s378, 8
        %s380 = scalar_select %p379, %s378, 8
        %s381 = smul.u32 128, %s380
        %s382 = sadd.s32 %s32, 1
        %s383 = smul.u32 %s382, 8
        %p384 = scmp.lt.s32.totalorder %s33, 0
        %s385 = scalar_select %p384, %s33, 0
        %s386 = scalar_lea.vmem %s4, %s385
        %s387 = smul.u32 8, %s32
        %v388 = vld [vmem:[%s325] sm:$0xff]
        %v389 = vld [vmem:[%s325 + $0x8] sm:$0xff]
        %v390 = vld [vmem:[%s325 + $0x10] sm:$0xff]
        %v391 = vld [vmem:[%s325 + $0x18] sm:$0xff]
        %v392 = vld [vmem:[%s325 + $0x20] sm:$0xff]
        %v393 = vld [vmem:[%s325 + $0x28] sm:$0xff]
        %v394 = vld [vmem:[%s325 + $0x30] sm:$0xff]
        %v395 = vld [vmem:[%s325 + $0x38] sm:$0xff]
        %v396 = vld [vmem:[#allocation7] sm:$0xff]
        %v397 = vld [vmem:[#allocation7 + $0x8] sm:$0xff]
        %v398 = vld [vmem:[#allocation7 + $0x10] sm:$0xff]
        %v399 = vld [vmem:[#allocation7 + $0x18] sm:$0xff]
        %v400 = vld [vmem:[#allocation7 + $0x20] sm:$0xff]
        %v401 = vld [vmem:[#allocation7 + $0x28] sm:$0xff]
        %v402 = vld [vmem:[#allocation7 + $0x30] sm:$0xff]
        %v403 = vld [vmem:[#allocation7 + $0x38] sm:$0xff]
        %v404 = vld [vmem:[#allocation7 + $0x40] sm:$0xff]
        %v405 = vld [vmem:[#allocation7 + $0x48] sm:$0xff]
        %v406 = vld [vmem:[#allocation7 + $0x50] sm:$0xff]
        %v407 = vld [vmem:[#allocation7 + $0x58] sm:$0xff]
        %v408 = vld [vmem:[#allocation7 + $0x60] sm:$0xff]
        %v409 = vld [vmem:[#allocation7 + $0x68] sm:$0xff]
        %v410 = vld [vmem:[#allocation7 + $0x70] sm:$0xff]
        %v411 = vld [vmem:[#allocation7 + $0x78] sm:$0xff]
        %412 = vmatprep.subr.mxu0 0.0
        %413 = vmatpush1.msra.mxu0 %v396
        %414 = vmatprep.subr.mxu0 0.0
        %415 = vmatpush1.msra.mxu0 %v397
        %416 = vmatprep.subr.mxu0 0.0
        %417 = vmatpush1.msra.mxu0 %v398
        %418 = vmatprep.subr.mxu0 0.0
        %419 = vmatpush1.msra.mxu0 %v399
        %420 = vmatprep.subr.mxu0 0.0
        %421 = vmatpush1.msra.mxu0 %v400
        %422 = vmatprep.subr.mxu0 0.0
        %423 = vmatpush1.msra.mxu0 %v401
        %424 = vmatprep.subr.mxu0 0.0
        %425 = vmatpush1.msra.mxu0 %v402
        %426 = vmatprep.subr.mxu0 0.0
        %427 = vmatpush1.msra.mxu0 %v403
        %428 = vmatprep.subr.mxu0 0.0
        %429 = vmatpush1.msra.mxu0 %v404
        %430 = vmatprep.subr.mxu0 0.0
        %431 = vmatpush1.msra.mxu0 %v405
        %432 = vmatprep.subr.mxu0 0.0
        %433 = vmatpush1.msra.mxu0 %v406
        %434 = vmatprep.subr.mxu0 0.0
        %435 = vmatpush1.msra.mxu0 %v407
        %436 = vmatprep.subr.mxu0 0.0
        %437 = vmatpush1.msra.mxu0 %v408
        %438 = vmatprep.subr.mxu0 0.0
        %439 = vmatpush1.msra.mxu0 %v409
        %440 = vmatprep.subr.mxu0 0.0
        %441 = vmatpush1.msra.mxu0 %v410
        %442 = vmatprep.subr.mxu0 0.0
        %443 = vmatpush1.msra.mxu0 %v411
        %444 = vmatprep.subr.mxu0 0.0
        %445 = vmatpush1.msra.mxu0 0.0
        %446 = vmatprep.subr.mxu0 0.0
        %447 = vmatpush1.msra.mxu0 0.0
        %448 = vmatprep.subr.mxu0 0.0
        %449 = vmatpush1.msra.mxu0 0.0
        %450 = vmatprep.subr.mxu0 0.0
        %451 = vmatpush1.msra.mxu0 0.0
        %452 = vmatprep.subr.mxu0 0.0
        %453 = vmatpush1.msra.mxu0 0.0
        %454 = vmatprep.subr.mxu0 0.0
        %455 = vmatpush1.msra.mxu0 0.0
        %456 = vmatprep.subr.mxu0 0.0
        %457 = vmatpush1.msra.mxu0 0.0
        %458 = vmatprep.subr.mxu0 0.0
        %459 = vmatpush1.msra.mxu0 0.0
        %460 = vmatprep.subr.mxu0 0.0
        %461 = vmatpush1.msra.mxu0 0.0
        %462 = vmatprep.subr.mxu0 0.0
        %463 = vmatpush1.msra.mxu0 0.0
        %464 = vmatprep.subr.mxu0 0.0
        %465 = vmatpush1.msra.mxu0 0.0
        %466 = vmatprep.subr.mxu0 0.0
        %467 = vmatpush1.msra.mxu0 0.0
        %468 = vmatprep.subr.mxu0 0.0
        %469 = vmatpush1.msra.mxu0 0.0
        %470 = vmatprep.subr.mxu0 0.0
        %471 = vmatpush1.msra.mxu0 0.0
        %472 = vmatprep.subr.mxu0 0.0
        %473 = vmatpush1.msra.mxu0 0.0
        %474 = vmatprep.subr.mxu0 0.0
        %475 = vmatpush1.msra.mxu0 0.0
        %476 = vmatprep.mubr.f32.mxu0 0.0
        %477 = vmatmul.mubr.f32.gmra.mrb[0].mxu0 %v388
        %v478 = vpop.f32.mrb[0].mxu0
        %v479 = vadd.f32 0.0, %v478
        %v480 = vpop.f32.mrb[0].mxu0
        %481 = vmatprep.mubr.f32.mxu0 0.0
        %482 = vmatmul.mubr.f32.gmra.mrb[0].mxu0 %v389
        %v483 = vpop.f32.mrb[0].mxu0
        %v484 = vadd.f32 0.0, %v483
        %v485 = vpop.f32.mrb[0].mxu0
        %486 = vmatprep.mubr.f32.mxu0 0.0
        %487 = vmatmul.mubr.f32.gmra.mrb[0].mxu0 %v390
        %v488 = vpop.f32.mrb[0].mxu0
        %v489 = vadd.f32 0.0, %v488
        %v490 = vpop.f32.mrb[0].mxu0
        %491 = vmatprep.mubr.f32.mxu0 0.0
        %492 = vmatmul.mubr.f32.gmra.mrb[0].mxu0 %v391
        %v493 = vpop.f32.mrb[0].mxu0
        %v494 = vadd.f32 0.0, %v493
        %v495 = vpop.f32.mrb[0].mxu0
        %496 = vmatprep.mubr.f32.mxu0 0.0
        %497 = vmatmul.mubr.f32.gmra.mrb[0].mxu0 %v392
        %v498 = vpop.f32.mrb[0].mxu0
        %v499 = vadd.f32 0.0, %v498
        %v500 = vpop.f32.mrb[0].mxu0
        %501 = vmatprep.mubr.f32.mxu0 0.0
        %502 = vmatmul.mubr.f32.gmra.mrb[0].mxu0 %v393
        %v503 = vpop.f32.mrb[0].mxu0
        %v504 = vadd.f32 0.0, %v503
        %v505 = vpop.f32.mrb[0].mxu0
        %506 = vmatprep.mubr.f32.mxu0 0.0
        %507 = vmatmul.mubr.f32.gmra.mrb[0].mxu0 %v394
        %v508 = vpop.f32.mrb[0].mxu0
        %v509 = vadd.f32 0.0, %v508
        %v510 = vpop.f32.mrb[0].mxu0
        %511 = vmatprep.mubr.f32.mxu0 0.0
        %512 = vmatmul.mubr.f32.gmra.mrb[0].mxu0 %v395
        %v513 = vpop.f32.mrb[0].mxu0
        %v514 = vadd.f32 0.0, %v513
        %v515 = vpop.f32.mrb[0].mxu0
        %516 = vdwg.mxu0
        %v517 = vld [vmem:[%s386] sm:$0x1]
        %s518 = scalar_lea.vmem %s325, 8 [#allocation2]
        %v519 = vld [vmem:[%s518] sm:$0xff]
        %v520 = vld [vmem:[%s518 + $0x8] sm:$0xff]
        %v521 = vld [vmem:[%s518 + $0x10] sm:$0xff]
        %v522 = vld [vmem:[%s518 + $0x18] sm:$0xff]
        %v523 = vld [vmem:[%s518 + $0x20] sm:$0xff]
        %v524 = vld [vmem:[%s518 + $0x28] sm:$0xff]
        %v525 = vld [vmem:[%s518 + $0x30] sm:$0xff]
        %v526 = vld [vmem:[#allocation8] sm:$0xff]
        %v527 = vld [vmem:[#allocation8 + $0x8] sm:$0xff]
        %v528 = vld [vmem:[#allocation8 + $0x10] sm:$0xff]
        %v529 = vld [vmem:[#allocation8 + $0x18] sm:$0xff]
        %v530 = vld [vmem:[#allocation8 + $0x20] sm:$0xff]
        %v531 = vld [vmem:[#allocation8 + $0x28] sm:$0xff]
        %v532 = vld [vmem:[#allocation8 + $0x30] sm:$0xff]
        %v533 = vld [vmem:[#allocation8 + $0x38] sm:$0xff]
        %v534 = vld [vmem:[#allocation8 + $0x40] sm:$0xff]
        %v535 = vld [vmem:[#allocation8 + $0x48] sm:$0xff]
        %v536 = vld [vmem:[#allocation8 + $0x50] sm:$0xff]
        %v537 = vld [vmem:[#allocation8 + $0x58] sm:$0xff]
        %v538 = vld [vmem:[#allocation8 + $0x60] sm:$0xff]
        %v539 = vld [vmem:[#allocation8 + $0x68] sm:$0xff]
        %v540 = vld [vmem:[#allocation8 + $0x70] sm:$0xff]
        %v541 = vld [vmem:[#allocation8 + $0x78] sm:$0xff]
        %542 = vmatprep.subr.mxu0 0.0
        %543 = vmatpush1.msra.mxu0 %v526
        %544 = vmatprep.subr.mxu0 0.0
        %545 = vmatpush1.msra.mxu0 %v527
        %546 = vmatprep.subr.mxu0 0.0
        %547 = vmatpush1.msra.mxu0 %v528
        %548 = vmatprep.subr.mxu0 0.0
        %549 = vmatpush1.msra.mxu0 %v529
        %550 = vmatprep.subr.mxu0 0.0
        %551 = vmatpush1.msra.mxu0 %v530
        %552 = vmatprep.subr.mxu0 0.0
        %553 = vmatpush1.msra.mxu0 %v531
        %554 = vmatprep.subr.mxu0 0.0
        %555 = vmatpush1.msra.mxu0 %v532
        %556 = vmatprep.subr.mxu0 0.0
        %557 = vmatpush1.msra.mxu0 %v533
        %558 = vmatprep.subr.mxu0 0.0
        %559 = vmatpush1.msra.mxu0 %v534
        %560 = vmatprep.subr.mxu0 0.0
        %561 = vmatpush1.msra.mxu0 %v535
        %562 = vmatprep.subr.mxu0 0.0
        %563 = vmatpush1.msra.mxu0 %v536
        %564 = vmatprep.subr.mxu0 0.0
        %565 = vmatpush1.msra.mxu0 %v537
        %566 = vmatprep.subr.mxu0 0.0
        %567 = vmatpush1.msra.mxu0 %v538
        %568 = vmatprep.subr.mxu0 0.0
        %569 = vmatpush1.msra.mxu0 %v539
        %570 = vmatprep.subr.mxu0 0.0
        %571 = vmatpush1.msra.mxu0 %v540
        %572 = vmatprep.subr.mxu0 0.0
        %573 = vmatpush1.msra.mxu0 %v541
        %574 = vmatprep.subr.mxu0 0.0
        %575 = vmatpush1.msra.mxu0 0.0
        %576 = vmatprep.subr.mxu0 0.0
        %577 = vmatpush1.msra.mxu0 0.0
        %578 = vmatprep.subr.mxu0 0.0
        %579 = vmatpush1.msra.mxu0 0.0
        %580 = vmatprep.subr.mxu0 0.0
        %581 = vmatpush1.msra.mxu0 0.0
        %582 = vmatprep.subr.mxu0 0.0
        %583 = vmatpush1.msra.mxu0 0.0
        %584 = vmatprep.subr.mxu0 0.0
        %585 = vmatpush1.msra.mxu0 0.0
        %586 = vmatprep.subr.mxu0 0.0
        %587 = vmatpush1.msra.mxu0 0.0
        %588 = vmatprep.subr.mxu0 0.0
        %589 = vmatpush1.msra.mxu0 0.0
        %590 = vmatprep.subr.mxu0 0.0
        %591 = vmatpush1.msra.mxu0 0.0
        %592 = vmatprep.subr.mxu0 0.0
        %593 = vmatpush1.msra.mxu0 0.0
        %594 = vmatprep.subr.mxu0 0.0
        %595 = vmatpush1.msra.mxu0 0.0
        %596 = vmatprep.subr.mxu0 0.0
        %597 = vmatpush1.msra.mxu0 0.0
        %598 = vmatprep.subr.mxu0 0.0
        %599 = vmatpush1.msra.mxu0 0.0
        %600 = vmatprep.subr.mxu0 0.0
        %601 = vmatpush1.msra.mxu0 0.0
        %602 = vmatprep.subr.mxu0 0.0
        %603 = vmatpush1.msra.mxu0 0.0
        %604 = vmatprep.subr.mxu0 0.0
        %605 = vmatpush1.msra.mxu0 0.0
        %606 = vmatprep.mubr.f32.mxu0 0.0
        %607 = vmatmul.mubr.f32.gmra.mrb[0].mxu0 %v519
        %v608 = vpop.f32.mrb[0].mxu0
        %v609 = vadd.f32 0.0, %v608
        %v610 = vpop.f32.mrb[0].mxu0
        %611 = vmatprep.mubr.f32.mxu0 0.0
        %612 = vmatmul.mubr.f32.gmra.mrb[0].mxu0 %v520
        %v613 = vpop.f32.mrb[0].mxu0
        %v614 = vadd.f32 0.0, %v613
        %v615 = vpop.f32.mrb[0].mxu0
        %616 = vmatprep.mubr.f32.mxu0 0.0
        %617 = vmatmul.mubr.f32.gmra.mrb[0].mxu0 %v521
        %v618 = vpop.f32.mrb[0].mxu0
        %v619 = vadd.f32 0.0, %v618
        %v620 = vpop.f32.mrb[0].mxu0
        %621 = vmatprep.mubr.f32.mxu0 0.0
        %622 = vmatmul.mubr.f32.gmra.mrb[0].mxu0 %v522
        %v623 = vpop.f32.mrb[0].mxu0
        %v624 = vadd.f32 0.0, %v623
        %v625 = vpop.f32.mrb[0].mxu0
        %626 = vmatprep.mubr.f32.mxu0 0.0
        %627 = vmatmul.mubr.f32.gmra.mrb[0].mxu0 %v523
        %v628 = vpop.f32.mrb[0].mxu0
        %v629 = vadd.f32 0.0, %v628
        %v630 = vpop.f32.mrb[0].mxu0
        %631 = vmatprep.mubr.f32.mxu0 0.0
        %632 = vmatmul.mubr.f32.gmra.mrb[0].mxu0 %v524
        %v633 = vpop.f32.mrb[0].mxu0
        %v634 = vadd.f32 0.0, %v633
        %v635 = vpop.f32.mrb[0].mxu0
        %636 = vmatprep.mubr.f32.mxu0 0.0
        %637 = vmatmul.mubr.f32.gmra.mrb[0].mxu0 %v525
        %v638 = vpop.f32.mrb[0].mxu0
        %v639 = vadd.f32 0.0, %v638
        %v640 = vpop.f32.mrb[0].mxu0
        %641 = vdwg.mxu0
        %v642 = vadd.f32 %v479, %v609
        %v643 = vadd.f32 %v484, %v614
        %v644 = vadd.f32 %v489, %v619
        %v645 = vadd.f32 %v494, %v624
        %v646 = vadd.f32 %v499, %v629
        %v647 = vadd.f32 %v504, %v634
        %v648 = vadd.f32 %v509, %v639
        %v650 = vlaneseq
        %v651 = vshrl.u32 %v650, 7
        %v652 = vsub.s32 0, %v651
        %v653 = vrot.slane %v517, %v652
        %v655 = vadd.f32 %v642, %v653
        %v656 = vadd.f32 %v643, %v653
        %v657 = vadd.f32 %v644, %v653
        %v658 = vadd.f32 %v645, %v653
        %v659 = vadd.f32 %v646, %v653
        %v660 = vadd.f32 %v647, %v653
        %v661 = vadd.f32 %v648, %v653
        %662 = vst [vmem:[%s376] sm:$0xff] %v655
        %663 = vst [vmem:[%s376 + $0x8] sm:$0xff] %v656
        %664 = vst [vmem:[%s376 + $0x10] sm:$0xff] %v657
        %665 = vst [vmem:[%s376 + $0x18] sm:$0xff] %v658
        %666 = vst [vmem:[%s376 + $0x20] sm:$0xff] %v659
        %667 = vst [vmem:[%s376 + $0x28] sm:$0xff] %v660
        %668 = vst [vmem:[%s376 + $0x30] sm:$0xff] %v661
        %v669 = vld [vmem:[%s334] sm:$0xff]
        %v670 = vld [vmem:[#allocation8] sm:$0xff]
        %v671 = vld [vmem:[#allocation8 + $0x8] sm:$0xff]
        %v672 = vld [vmem:[#allocation8 + $0x10] sm:$0xff]
        %v673 = vld [vmem:[#allocation8 + $0x18] sm:$0xff]
        %v674 = vld [vmem:[#allocation8 + $0x20] sm:$0xff]
        %v675 = vld [vmem:[#allocation8 + $0x28] sm:$0xff]
        %v676 = vld [vmem:[#allocation8 + $0x30] sm:$0xff]
        %v677 = vld [vmem:[#allocation8 + $0x38] sm:$0xff]
        %v678 = vld [vmem:[#allocation8 + $0x40] sm:$0xff]
        %v679 = vld [vmem:[#allocation8 + $0x48] sm:$0xff]
        %v680 = vld [vmem:[#allocation8 + $0x50] sm:$0xff]
        %v681 = vld [vmem:[#allocation8 + $0x58] sm:$0xff]
        %v682 = vld [vmem:[#allocation8 + $0x60] sm:$0xff]
        %v683 = vld [vmem:[#allocation8 + $0x68] sm:$0xff]
        %v684 = vld [vmem:[#allocation8 + $0x70] sm:$0xff]
        %v685 = vld [vmem:[#allocation8 + $0x78] sm:$0xff]
        %686 = vmatprep.subr.mxu0 0.0
        %687 = vmatpush1.msra.mxu0 %v670
        %688 = vmatprep.subr.mxu0 0.0
        %689 = vmatpush1.msra.mxu0 %v671
        %690 = vmatprep.subr.mxu0 0.0
        %691 = vmatpush1.msra.mxu0 %v672
        %692 = vmatprep.subr.mxu0 0.0
        %693 = vmatpush1.msra.mxu0 %v673
        %694 = vmatprep.subr.mxu0 0.0
        %695 = vmatpush1.msra.mxu0 %v674
        %696 = vmatprep.subr.mxu0 0.0
        %697 = vmatpush1.msra.mxu0 %v675
        %698 = vmatprep.subr.mxu0 0.0
        %699 = vmatpush1.msra.mxu0 %v676
        %700 = vmatprep.subr.mxu0 0.0
        %701 = vmatpush1.msra.mxu0 %v677
        %702 = vmatprep.subr.mxu0 0.0
        %703 = vmatpush1.msra.mxu0 %v678
        %704 = vmatprep.subr.mxu0 0.0
        %705 = vmatpush1.msra.mxu0 %v679
        %706 = vmatprep.subr.mxu0 0.0
        %707 = vmatpush1.msra.mxu0 %v680
        %708 = vmatprep.subr.mxu0 0.0
        %709 = vmatpush1.msra.mxu0 %v681
        %710 = vmatprep.subr.mxu0 0.0
        %711 = vmatpush1.msra.mxu0 %v682
        %712 = vmatprep.subr.mxu0 0.0
        %713 = vmatpush1.msra.mxu0 %v683
        %714 = vmatprep.subr.mxu0 0.0
        %715 = vmatpush1.msra.mxu0 %v684
        %716 = vmatprep.subr.mxu0 0.0
        %717 = vmatpush1.msra.mxu0 %v685
        %718 = vmatprep.subr.mxu0 0.0
        %719 = vmatpush1.msra.mxu0 0.0
        %720 = vmatprep.subr.mxu0 0.0
        %721 = vmatpush1.msra.mxu0 0.0
        %722 = vmatprep.subr.mxu0 0.0
        %723 = vmatpush1.msra.mxu0 0.0
        %724 = vmatprep.subr.mxu0 0.0
        %725 = vmatpush1.msra.mxu0 0.0
        %726 = vmatprep.subr.mxu0 0.0
        %727 = vmatpush1.msra.mxu0 0.0
        %728 = vmatprep.subr.mxu0 0.0
        %729 = vmatpush1.msra.mxu0 0.0
        %730 = vmatprep.subr.mxu0 0.0
        %731 = vmatpush1.msra.mxu0 0.0
        %732 = vmatprep.subr.mxu0 0.0
        %733 = vmatpush1.msra.mxu0 0.0
        %734 = vmatprep.subr.mxu0 0.0
        %735 = vmatpush1.msra.mxu0 0.0
        %736 = vmatprep.subr.mxu0 0.0
        %737 = vmatpush1.msra.mxu0 0.0
        %738 = vmatprep.subr.mxu0 0.0
        %739 = vmatpush1.msra.mxu0 0.0
        %740 = vmatprep.subr.mxu0 0.0
        %741 = vmatpush1.msra.mxu0 0.0
        %742 = vmatprep.subr.mxu0 0.0
        %743 = vmatpush1.msra.mxu0 0.0
        %744 = vmatprep.subr.mxu0 0.0
        %745 = vmatpush1.msra.mxu0 0.0
        %746 = vmatprep.subr.mxu0 0.0
        %747 = vmatpush1.msra.mxu0 0.0
        %748 = vmatprep.subr.mxu0 0.0
        %749 = vmatpush1.msra.mxu0 0.0
        %750 = vmatprep.mubr.f32.mxu0 0.0
        %751 = vmatmul.mubr.f32.gmra.mrb[0].mxu0 %v669
        %v752 = vpop.f32.mrb[0].mxu0
        %v753 = vadd.f32 0.0, %v752
        %v754 = vpop.f32.mrb[0].mxu0
        %755 = vdwg.mxu0
        %v756 = vadd.f32 %v514, %v753
        %v757 = vadd.f32 %v756, %v653
        %s758 = scalar_lea.vmem %s376, 56 [#allocation10]
        %759 = vst [vmem:[%s758] sm:$0xff] %v757
        %s760 = sand.u32 %s195, 1
        %s761 = scalar_lea.sflag [#allocation4], %s760
        %s762 = sand.u32 %s195, 1
        %s763 = smul.addr %s762, 64
        %s764 = scalar_lea.vmem [#allocation10], %s763
        // Predicated region
        $region57: #{tpu_custom_call.1} parent=39 // pred_check
          %p765 = pneg %p205
        $region58: #{tpu_custom_call.1} parent=39 // pred_check_branch
          %767 = sbr.rel (%p765) target = $region60
        $region59: #{tpu_custom_call.1} parent=39 // pred_region
          %s768 = smul.u32 8, %s32
          %s770 = ssub.s32 1024, 1024
          %771 = vsyncadd %s761, %s770
          %s772 = sadd.s32 %s33, %s768
          %s773 = smul.addr %s31, 8
          %s774 = sadd.s32 %s772, %s773
          %s775 = smul.addr %s774, 128
          %s776 = scalar_lea.hbm %s5, %s775
          %s777 = sshll.u32 %s764, 4
          %s778 = int_to_ptr.vmem [resolvable:$true] %s777
          %783 = dma.vmem_to_hbm [thread:$0]  %s778, 1024, %s776, %s761, 128, 128, 8
        $region60: #{tpu_custom_call.1} parent=39 // pred_fallthru
          _
      $region40: #{tpu_custom_call.1} parent=5 // pred_fallthru
        _
      %p784 = scmp.le.s32.totalorder 2, %s21
      // Predicated region
      $region61: #{tpu_custom_call.1} parent=5 // pred_check
        %p785 = pneg %p784
      $region62: #{tpu_custom_call.1} parent=5 // pred_check_branch
        %787 = sbr.rel (%p785) target = $region64
      $region63: #{tpu_custom_call.1} parent=5 // pred_region
        %s788 = ssub.s32 %s21, 2
        // Predicated region
        $region65: #{tpu_custom_call.1} parent=63 // pred_check
          %p789 = pneg %p211
        $region66: #{tpu_custom_call.1} parent=63 // pred_check_branch
          %791 = sbr.rel (%p789) target = $region68
        $region67: #{tpu_custom_call.1} parent=63 // pred_region
          %s792 = sand.u32 %s196, 1
          %s793 = scalar_lea.sflag [#allocation4], %s792
          %s794 = sand.u32 %s196, 1
          %s795 = smul.addr %s794, 64
          %s796 = scalar_lea.vmem [#allocation10], %s795
          %797 = dma.done %s793, 1024
        $region68: #{tpu_custom_call.1} parent=63 // pred_fallthru
          _
      $region64: #{tpu_custom_call.1} parent=5 // pred_fallthru
        _
    $region6: #{tpu_custom_call.1} parent=1 // loop_footer
      %s25 = sadd.s32 1, %s21
    $region7: #{tpu_custom_call.1} parent=1 // loop_footer_branch
      %20 = sbr.rel target = $region3
    $region8: #{tpu_custom_call.1} parent=1 // loop_exit
      _
    %798 = vsyncpa [#allocation3], 1
    %s799 = scalar_lea.sflag [#allocation3], 1
    %800 = vsyncpa %s799, 1
    %801 = vsyncpa [#allocation6], 1
    %s802 = scalar_lea.sflag [#allocation6], 1
    %803 = vsyncpa %s802, 1
    %804 = vsyncpa [#allocation9], 1
    %805 = vsyncpa [#allocation4], 1
    %s806 = scalar_lea.sflag [#allocation4], 1
    %807 = vsyncpa %s806, 1

</llo_original>
